<compile_context>
chip_gen: v7x
topology: tpu7x:2x2x1
jax: 0.10.0
libtpu: 0.0.40
codegen_flags: <defaults>
</compile_context>

<pallas_src>
import jax
import jax.numpy as jnp
from jax.experimental import pallas as pl
from jax.experimental.pallas import tpu as pltpu


def _round_up(x: int, m: int) -> int:
    return (x + m - 1) // m * m


def _sine_layer_kernel(x_ref, w_ref, b_ref, o_ref):
    # MXU matmul (bf16 or f32 inputs, f32 accumulation) + f32 bias + f32 sin.
    # omega_0 is already folded into w_ref / b_ref by the wrapper, so the hot
    # path has no per-element scale.
    acc = jnp.dot(x_ref[...], w_ref[...], preferred_element_type=jnp.float32)
    acc = acc + b_ref[...]                      # (1, d_out) broadcasts over rows
    o_ref[...] = jnp.sin(acc).astype(o_ref.dtype)


def sine_layer_forward(x, w, b, omega_0=30.0, *, tile_m=256,
                       matmul_dtype=jnp.bfloat16):
    """SIREN SineLayer forward: sin(omega_0 * (x @ w + b)).

    x: (N, d_in) f32
    w: (d_in, d_out) f32   (transposed torch.nn.Linear.weight)
    b: (d_out,) or (1, d_out) f32
    """
    n, d_in = x.shape
    d_in_w, d_out = w.shape
    assert d_in == d_in_w, "weight must be (d_in, d_out)"
    b = jnp.asarray(b, jnp.float32).reshape(1, d_out)

    # ---- parameter prep (in a real model do this ONCE at init, not per call) ----
    # Fold omega_0 into weights/bias.
    w_s = w.astype(jnp.float32) * omega_0
    b_s = b * omega_0

    # Lane-dense padding of the feature dims (multiples of 128).
    d_in_p = _round_up(d_in, 128)
    d_out_p = _round_up(d_out, 128)

    # Sublane-dense row tiling; cap the tile at (padded) N for small inputs.
    tile_m_eff = min(tile_m, _round_up(n, 8))
    n_p = _round_up(n, tile_m_eff)

    x_p = jnp.pad(x.astype(jnp.float32),
                  ((0, n_p - n), (0, d_in_p - d_in))).astype(matmul_dtype)
    w_p = jnp.pad(w_s, ((0, d_in_p - d_in), (0, d_out_p - d_out))).astype(matmul_dtype)
    b_p = jnp.pad(b_s, ((0, 0), (0, d_out_p - d_out)))          # bias stays f32

    mm_bytes = jnp.dtype(matmul_dtype).itemsize
    cost = pl.CostEstimate(
        flops=2 * n_p * d_in_p * d_out_p,
        transcendentals=n_p * d_out_p,
        bytes_accessed=(n_p * d_in_p + d_in_p * d_out_p) * mm_bytes
        + (d_out_p + n_p * d_out_p) * 4,
    )

    out_p = pl.pallas_call(
        _sine_layer_kernel,
        out_shape=jax.ShapeDtypeStruct((n_p, d_out_p), jnp.float32),
        grid_spec=pl.GridSpec(
            grid=(n_p // tile_m_eff,),
            in_specs=[
                pl.BlockSpec((tile_m_eff, d_in_p), lambda i: (i, 0)),   # x row slab
                pl.BlockSpec((d_in_p, d_out_p), lambda i: (0, 0)),      # resident W
                pl.BlockSpec((1, d_out_p), lambda i: (0, 0)),           # resident bias
            ],
            out_specs=pl.BlockSpec((tile_m_eff, d_out_p), lambda i: (i, 0)),
        ),
        compiler_params=pltpu.CompilerParams(
            dimension_semantics=("parallel",),
        ),
        cost_estimate=cost,
    )(x_p, w_p, b_p)

    # Strip row / feature padding back to the logical shape.
    return out_p[:n, :d_out].astype(x.dtype)

    # TODO(synk): for a full SIREN MLP, fuse consecutive SineLayers into one
    # pallas_call keeping the (tile_m, hidden) activation resident in VMEM.


def init_sine_layer_params(key, d_in, d_out, is_first=False, omega_0=30.0):
    """Deterministic SIREN init (matches the torch module): W ~ U(-bound, bound), b = 0."""
    if is_first:
        bound = 1.0 / d_in
    else:
        bound = float(jnp.sqrt(6.0 / d_in) / omega_0)
    # Stored transposed relative to torch.nn.Linear.weight: (d_in, d_out).
    w = jax.random.uniform(key, (d_in, d_out), jnp.float32, -bound, bound)
    b = jnp.zeros((1, d_out), jnp.float32)
    return w, b


if __name__ == "__main__":
    # Small shapes consistent with the module: N coordinate points of dim d_in.
    N, D_IN, D_OUT = 32, 32, 64
    OMEGA_0 = 30.0
    IS_FIRST = True

    key = jax.random.PRNGKey(0)
    k_x, k_w = jax.random.split(key)

    x = jax.random.normal(k_x, (N, D_IN), jnp.float32)
    w, b = init_sine_layer_params(k_w, D_IN, D_OUT, is_first=IS_FIRST, omega_0=OMEGA_0)

    # Reference in plain JAX.
    ref = jnp.sin(OMEGA_0 * (x @ w + b))

    # f32 matmul path: bit-tight check.
    out_f32 = sine_layer_forward(x, w, b, omega_0=OMEGA_0, matmul_dtype=jnp.float32)
    out_f32 = jax.block_until_ready(out_f32)
    assert out_f32.shape == (N, D_OUT)
    assert jnp.allclose(out_f32, ref, atol=1e-5, rtol=1e-5)

    # bf16 matmul path (default, for v6e/v7x MXU throughput): looser tolerance.
    out_bf16 = sine_layer_forward(x, w, b, omega_0=OMEGA_0)   # matmul_dtype=bf16
    out_bf16 = jax.block_until_ready(out_bf16)
    assert out_bf16.shape == (N, D_OUT)
    assert jnp.allclose(out_bf16, ref, atol=3e-2, rtol=3e-2)

    print("KERNEL_OK")
</pallas_src>

<mosaic_0001>
module attributes {stable_mosaic.version = 11 : i64} {
  func.func @_sine_layer_kernel(%arg0: i32, %arg1: memref<32x128xf32, #tpu.memory_space<vmem>>, %arg2: memref<128x128xf32, #tpu.memory_space<vmem>>, %arg3: memref<1x128xf32, #tpu.memory_space<vmem>>, %arg4: memref<32x128xf32, #tpu.memory_space<vmem>>) attributes {dimension_semantics = [#tpu.dimension_semantics<parallel>], iteration_bounds = array<i64: 1>, scalar_prefetch = 0 : i64, scratch_operands = 0 : i64, tpu.core_type = #tpu.core_type<tc>, window_params = [{transform_indices = @transform_0, window_bounds = array<i64: 32, 128>}, {pipeline_mode = #tpu.pipeline_mode<synchronous>, transform_indices = @transform_1, window_bounds = array<i64: 128, 128>}, {pipeline_mode = #tpu.pipeline_mode<synchronous>, transform_indices = @transform_2, window_bounds = array<i64: 1, 128>}, {transform_indices = @transform_3, window_bounds = array<i64: 32, 128>}]} {
    %c0 = arith.constant 0 : index
    %c0_0 = arith.constant 0 : index
    %0 = vector.load %arg1[%c0, %c0_0] : memref<32x128xf32, #tpu.memory_space<vmem>>, vector<32x128xf32>
    %c0_1 = arith.constant 0 : index
    %c0_2 = arith.constant 0 : index
    %1 = vector.load %arg2[%c0_1, %c0_2] : memref<128x128xf32, #tpu.memory_space<vmem>>, vector<128x128xf32>
    %cst = arith.constant dense<0.000000e+00> : vector<32x128xf32>
    %2 = tpu.matmul %0, %1, %cst {dimension_numbers = #tpu.dot_dimension_numbers<[1], [0], [0], [1], [0, 0, 1, 1], [], []>} : vector<32x128xf32>, vector<128x128xf32>, vector<32x128xf32> -> vector<32x128xf32>
    %c0_3 = arith.constant 0 : index
    %c0_4 = arith.constant 0 : index
    %3 = vector.load %arg3[%c0_3, %c0_4] : memref<1x128xf32, #tpu.memory_space<vmem>>, vector<1x128xf32>
    %4 = vector.broadcast %3 : vector<1x128xf32> to vector<32x128xf32>
    %5 = arith.addf %2, %4 : vector<32x128xf32>
    %6 = math.sin %5 : vector<32x128xf32>
    %c0_5 = arith.constant 0 : index
    %c0_6 = arith.constant 0 : index
    %7 = vector.load %arg4[%c0_5, %c0_6] : memref<32x128xf32, #tpu.memory_space<vmem>>, vector<32x128xf32>
    tpu.vector_store %arg4[%c0_5, %c0_6], %6 {strides = array<i32>} : memref<32x128xf32, #tpu.memory_space<vmem>>, vector<32x128xf32>,
    return
  }
  func.func @transform_0(%arg0: i32) -> (i32, i32) {
    %c0_i32 = arith.constant 0 : i32
    %c0_i32_0 = arith.constant 0 : i32
    return %arg0, %c0_i32 : i32, i32
  }
  func.func @transform_1(%arg0: i32) -> (i32, i32) {
    %c0_i32 = arith.constant 0 : i32
    %c0_i32_0 = arith.constant 0 : i32
    %c0_i32_1 = arith.constant 0 : i32
    return %c0_i32, %c0_i32_0 : i32, i32
  }
  func.func @transform_2(%arg0: i32) -> (i32, i32) {
    %c0_i32 = arith.constant 0 : i32
    %c0_i32_0 = arith.constant 0 : i32
    %c0_i32_1 = arith.constant 0 : i32
    return %c0_i32, %c0_i32_0 : i32, i32
  }
  func.func @transform_3(%arg0: i32) -> (i32, i32) {
    %c0_i32 = arith.constant 0 : i32
    %c0_i32_0 = arith.constant 0 : i32
    return %arg0, %c0_i32 : i32, i32
  }
}

</mosaic_0001>

<llo_original>
// kernel: tpu_custom_call.1
$region0: #{tpu_custom_call.1}
  #allocation0 [shape = 'u32[]', space=smem, size = 0x4, offset = 0x4, fixed_abs, tag = 'smem constant byte address 0x4 - core index']
  #allocation1 [shape = 'u32[144,128]{1,0:T(1,128)}', space=vmem, size = 0x12000, scoped, tag = 'internal scratch']
  %s0 = inlined_call_operand.hbm [shape: f32[32,128], index: 0, kind: input, shape index: {}]
  %s1 = inlined_call_operand.hbm [shape: f32[128,128], index: 1, kind: input, shape index: {}]
  %s2 = inlined_call_operand.vmem [shape: f32[1,128], index: 2, kind: input, shape index: {}]
  %s3 = inlined_call_operand.hbm [shape: f32[32,128], index: 3, kind: output, shape index: {}]
  %s4 = sld [smem:[#allocation0]]
  $region30: #{tpu_custom_call.1} parent=0
    _
  %s6 = ssub.s32 1, %s4
  %s7 = scalar_select 0, %s6, %s4
  $region1: #{tpu_custom_call.1} parent=0
    #allocation2 [shape = 'u8[16384]{0}', space=vmem, size = 0x4000, scoped, tag = 'input window, operand 0, single buffered']
    #allocation3 [shape = 's32[1]{0}', space=sflag, size = 0x4, scoped, tag = 'scoped memory for tpu_custom_call.1']
    #allocation4 [shape = 's32[1]{0}', space=sflag, size = 0x4, scoped, tag = 'scoped memory for tpu_custom_call.1']
    #allocation5 [shape = 'u8[65536]{0}', space=vmem, size = 0x10000, scoped, tag = 'input window, operand 1, single buffered']
    #allocation6 [shape = 's32[1]{0}', space=sflag, size = 0x4, scoped, tag = 'scoped memory for tpu_custom_call.1']
    #allocation7 [shape = 'u8[16384]{0}', space=vmem, size = 0x4000, scoped, tag = 'output window, operand 0, single buffered']
    %8 = vsyncpa [#allocation3], 0
    %9 = vsyncpa [#allocation6], 0
    %10 = vsyncpa [#allocation4], 0
    // Predicated region
    $region2: #{tpu_custom_call.1} parent=1 // pred_check
      _
    $region3: #{tpu_custom_call.1} parent=1 // pred_check_branch
      %12 = sbr.rel (0) target = $region5
    $region4: #{tpu_custom_call.1} parent=1 // pred_region
      %s14 = ssub.s32 512, 512
      %15 = vsyncadd [#allocation3], %s14
      %s16 = sshll.u32 [#allocation2], 4
      %s17 = int_to_ptr.vmem [resolvable:$true] %s16
      %22 = dma.hbm_to_vmem [thread:$0]  %s0, 512, %s17, [#allocation3], 128, 128, 8
    $region5: #{tpu_custom_call.1} parent=1 // pred_fallthru
      _
    // Predicated region
    $region6: #{tpu_custom_call.1} parent=1 // pred_check
      _
    $region7: #{tpu_custom_call.1} parent=1 // pred_check_branch
      %24 = sbr.rel (0) target = $region9
    $region8: #{tpu_custom_call.1} parent=1 // pred_region
      %s26 = ssub.s32 2048, 2048
      %27 = vsyncadd [#allocation6], %s26
      %s28 = sshll.u32 [#allocation5], 4
      %s29 = int_to_ptr.vmem [resolvable:$true] %s28
      %34 = dma.hbm_to_vmem [thread:$0]  %s1, 2048, %s29, [#allocation6], 128, 128, 8
    $region9: #{tpu_custom_call.1} parent=1 // pred_fallthru
      _
    // Predicated region
    $region10: #{tpu_custom_call.1} parent=1 // pred_check
      _
    $region11: #{tpu_custom_call.1} parent=1 // pred_check_branch
      %36 = sbr.rel (0) target = $region13
    $region12: #{tpu_custom_call.1} parent=1 // pred_region
      _
    $region13: #{tpu_custom_call.1} parent=1 // pred_fallthru
      _
    // Predicated region
    $region14: #{tpu_custom_call.1} parent=1 // pred_check
      _
    $region15: #{tpu_custom_call.1} parent=1 // pred_check_branch
      %38 = sbr.rel (0) target = $region17
    $region16: #{tpu_custom_call.1} parent=1 // pred_region
      %39 = dma.done [#allocation3], 512
    $region17: #{tpu_custom_call.1} parent=1 // pred_fallthru
      _
    // Predicated region
    $region18: #{tpu_custom_call.1} parent=1 // pred_check
      _
    $region19: #{tpu_custom_call.1} parent=1 // pred_check_branch
      %41 = sbr.rel (0) target = $region21
    $region20: #{tpu_custom_call.1} parent=1 // pred_region
      %42 = dma.done [#allocation6], 2048
    $region21: #{tpu_custom_call.1} parent=1 // pred_fallthru
      _
    %v43 = vld [vmem:[#allocation2] sm:$0xff]
    %v44 = vld [vmem:[#allocation2 + $0x8] sm:$0xff]
    %v45 = vld [vmem:[#allocation2 + $0x10] sm:$0xff]
    %v46 = vld [vmem:[#allocation2 + $0x18] sm:$0xff]
    %v47 = vld [vmem:[#allocation5] sm:$0xff]
    %v48 = vld [vmem:[#allocation5 + $0x8] sm:$0xff]
    %v49 = vld [vmem:[#allocation5 + $0x10] sm:$0xff]
    %v50 = vld [vmem:[#allocation5 + $0x18] sm:$0xff]
    %v51 = vld [vmem:[#allocation5 + $0x20] sm:$0xff]
    %v52 = vld [vmem:[#allocation5 + $0x28] sm:$0xff]
    %v53 = vld [vmem:[#allocation5 + $0x30] sm:$0xff]
    %v54 = vld [vmem:[#allocation5 + $0x38] sm:$0xff]
    %v55 = vld [vmem:[#allocation5 + $0x40] sm:$0xff]
    %v56 = vld [vmem:[#allocation5 + $0x48] sm:$0xff]
    %v57 = vld [vmem:[#allocation5 + $0x50] sm:$0xff]
    %v58 = vld [vmem:[#allocation5 + $0x58] sm:$0xff]
    %v59 = vld [vmem:[#allocation5 + $0x60] sm:$0xff]
    %v60 = vld [vmem:[#allocation5 + $0x68] sm:$0xff]
    %v61 = vld [vmem:[#allocation5 + $0x70] sm:$0xff]
    %v62 = vld [vmem:[#allocation5 + $0x78] sm:$0xff]
    %v63 = vld [vmem:[%s2] sm:$0x1]
    %v65 = vlaneseq
    %v66 = vshrl.u32 %v65, 7
    %v67 = vsub.s32 0, %v66
    %v68 = vrot.slane %v63, %v67
    %70 = vmatprep.subr.mxu0 0.0
    %71 = vmatpush1.msra.mxu0 %v47
    %72 = vmatprep.subr.mxu0 0.0
    %73 = vmatpush1.msra.mxu0 %v48
    %74 = vmatprep.subr.mxu0 0.0
    %75 = vmatpush1.msra.mxu0 %v49
    %76 = vmatprep.subr.mxu0 0.0
    %77 = vmatpush1.msra.mxu0 %v50
    %78 = vmatprep.subr.mxu0 0.0
    %79 = vmatpush1.msra.mxu0 %v51
    %80 = vmatprep.subr.mxu0 0.0
    %81 = vmatpush1.msra.mxu0 %v52
    %82 = vmatprep.subr.mxu0 0.0
    %83 = vmatpush1.msra.mxu0 %v53
    %84 = vmatprep.subr.mxu0 0.0
    %85 = vmatpush1.msra.mxu0 %v54
    %86 = vmatprep.subr.mxu0 0.0
    %87 = vmatpush1.msra.mxu0 %v55
    %88 = vmatprep.subr.mxu0 0.0
    %89 = vmatpush1.msra.mxu0 %v56
    %90 = vmatprep.subr.mxu0 0.0
    %91 = vmatpush1.msra.mxu0 %v57
    %92 = vmatprep.subr.mxu0 0.0
    %93 = vmatpush1.msra.mxu0 %v58
    %94 = vmatprep.subr.mxu0 0.0
    %95 = vmatpush1.msra.mxu0 %v59
    %96 = vmatprep.subr.mxu0 0.0
    %97 = vmatpush1.msra.mxu0 %v60
    %98 = vmatprep.subr.mxu0 0.0
    %99 = vmatpush1.msra.mxu0 %v61
    %100 = vmatprep.subr.mxu0 0.0
    %101 = vmatpush1.msra.mxu0 %v62
    %102 = vmatprep.subr.mxu0 0.0
    %103 = vmatpush1.msra.mxu0 0.0
    %104 = vmatprep.subr.mxu0 0.0
    %105 = vmatpush1.msra.mxu0 0.0
    %106 = vmatprep.subr.mxu0 0.0
    %107 = vmatpush1.msra.mxu0 0.0
    %108 = vmatprep.subr.mxu0 0.0
    %109 = vmatpush1.msra.mxu0 0.0
    %110 = vmatprep.subr.mxu0 0.0
    %111 = vmatpush1.msra.mxu0 0.0
    %112 = vmatprep.subr.mxu0 0.0
    %113 = vmatpush1.msra.mxu0 0.0
    %114 = vmatprep.subr.mxu0 0.0
    %115 = vmatpush1.msra.mxu0 0.0
    %116 = vmatprep.subr.mxu0 0.0
    %117 = vmatpush1.msra.mxu0 0.0
    %118 = vmatprep.subr.mxu0 0.0
    %119 = vmatpush1.msra.mxu0 0.0
    %120 = vmatprep.subr.mxu0 0.0
    %121 = vmatpush1.msra.mxu0 0.0
    %122 = vmatprep.subr.mxu0 0.0
    %123 = vmatpush1.msra.mxu0 0.0
    %124 = vmatprep.subr.mxu0 0.0
    %125 = vmatpush1.msra.mxu0 0.0
    %126 = vmatprep.subr.mxu0 0.0
    %127 = vmatpush1.msra.mxu0 0.0
    %128 = vmatprep.subr.mxu0 0.0
    %129 = vmatpush1.msra.mxu0 0.0
    %130 = vmatprep.subr.mxu0 0.0
    %131 = vmatpush1.msra.mxu0 0.0
    %132 = vmatprep.subr.mxu0 0.0
    %133 = vmatpush1.msra.mxu0 0.0
    %134 = vmatprep.mubr.f32.mxu0 0.0
    %135 = vmatmul.mubr.f32.gmra.mrb[0].mxu0 %v43
    %v136 = vpop.f32.mrb[0].mxu0
    %v137 = vadd.f32 %v68, %v136
    %v138 = vpop.f32.mrb[0].mxu0
    %139 = vmatprep.mubr.f32.mxu0 0.0
    %140 = vmatmul.mubr.f32.gmra.mrb[0].mxu0 %v44
    %v141 = vpop.f32.mrb[0].mxu0
    %v142 = vadd.f32 %v68, %v141
    %v143 = vpop.f32.mrb[0].mxu0
    %144 = vmatprep.mubr.f32.mxu0 0.0
    %145 = vmatmul.mubr.f32.gmra.mrb[0].mxu0 %v45
    %v146 = vpop.f32.mrb[0].mxu0
    %v147 = vadd.f32 %v68, %v146
    %v148 = vpop.f32.mrb[0].mxu0
    %149 = vmatprep.mubr.f32.mxu0 0.0
    %150 = vmatmul.mubr.f32.gmra.mrb[0].mxu0 %v46
    %v151 = vpop.f32.mrb[0].mxu0
    %v152 = vadd.f32 %v68, %v151
    %v153 = vpop.f32.mrb[0].mxu0
    %154 = vdwg.mxu0
    %v155 = vand.u32 2147483647, %v137
    %vm156 = vcmp.le.f32.partialorder %v155, 0.7853982
    %vm157 = vcmp.lt.s32.totalorder %v137, 0
    %v158 = vand.u32 %v137, 2139095040
    %v159 = vshrl.u32 %v158, 23
    %v160 = vsub.s32 %v159, 127
    %v161 = vand.u32 2147483647, %v137
    %v162 = vand.u32 %v161, 8388607
    %v163 = vor.u32 %v162, 8388608
    %v164 = vsub.s32 0, %v163
    %v165 = vadd.s32 %v160, 1
    %vm166 = vcmp.gt.s32.totalorder %v165, 0
    %v167 = vsel %vm166, %v165, 0
    %v168 = vshrl.u32 %v167, 5
    %v169 = vand.u32 %v167, 31
    %v170 = vsub.s32 32, %v169
    %v171 = vshrl.u32 683565275, %v170
    %v172 = vshll.u32 683565275, %v169
    %v173 = vshrl.u32 2475754826, %v170
    %v174 = vor.u32 %v172, %v173
    %v175 = vshll.u32 2475754826, %v169
    %v176 = vshrl.u32 2131351028, %v170
    %v177 = vor.u32 %v175, %v176
    %v178 = vshll.u32 2131351028, %v169
    %v179 = vshrl.u32 2102212464, %v170
    %v180 = vor.u32 %v178, %v179
    %v181 = vshll.u32 2102212464, %v169
    %v182 = vshrl.u32 920167782, %v170
    %v183 = vor.u32 %v181, %v182
    %v184 = vshll.u32 920167782, %v169
    %v185 = vshrl.u32 1326507024, %v170
    %v186 = vor.u32 %v184, %v185
    %vm187 = vcmp.lt.s32.totalorder %v168, 1
    %vm188 = vcmp.lt.s32.totalorder %v168, 2
    %vm189 = vcmp.lt.s32.totalorder %v168, 3
    %vm190 = vcmp.lt.s32.totalorder %v168, 4
    %v191 = vsel %vm187, %v171, %v174
    %v192 = vsel %vm190, %v180, 2102212464
    %v193 = vsel %vm189, %v177, %v192
    %v194 = vsel %vm188, %v191, %v193
    %v195 = vsel %vm187, %v174, %v177
    %v196 = vsel %vm190, %v183, 920167782
    %v197 = vsel %vm189, %v180, %v196
    %v198 = vsel %vm188, %v195, %v197
    %v199 = vsel %vm187, %v177, %v180
    %v200 = vsel %vm190, %v186, 1326507024
    %v201 = vsel %vm189, %v183, %v200
    %v202 = vsel %vm188, %v199, %v201
    %v203 = vshll.u32 %v163, 8
    %v204 = vmul.u32.u64.compose %v203, %v202
    %v205 = vextract.low.u32 %v204
    %v206 = vextract.high.u32 %v204
    %v207 = vmul.u32.u64.compose %v203, %v198
    %v208 = vextract.low.u32 %v207
    %v209 = vextract.high.u32 %v207
    %v210 = vmul.u32 %v203, %v194
    %v211 = vadd.s32 %v206, %v208
    %vm212 = vc.u32 %v206, %v208
    %v213 = vadd.s32 %v209, 1
    %v214 = vsel %vm212, %v213, %v209
    %v215 = vadd.s32 %v210, %v214
    %v216 = vadd.s32 %v215, 536870912
    %v217 = vshrl.u32 %v216, 30
    %v218 = vshll.u32 %v217, 30
    %v219 = vsub.s32 %v215, %v218
    %vm220 = vcmp.lt.s32.totalorder %v219, 0
    %v221 = vsub.s32 0, %v219
    %v222 = vsel %vm220, %v221, %v219
    %v223 = vclz %v222
    %v224 = vsub.s32 %v223, 2
    %vm225 = vcmp.gt.s32.totalorder 0, %v224
    %v226 = vsel %vm225, 0, %v224
    %v227 = vsub.s32 32, %v226
    %v228 = vshll.u32 %v219, %v226
    %v229 = vshrl.u32 %v211, %v227
    %v230 = vor.u32 %v228, %v229
    %v231 = vsub.s32 4294967266, %v226
    %v232 = vadd.s32 %v231, 127
    %v233 = vshll.u32 %v232, 23
    %v234 = vor.u32 4788187, %v233
    %v235 = vand.u32 2147483647, %v234
    %v237 = vcvt.s32.f32 %v230
    %v238 = vmul.f32 %v237, %v235
    %v239 = vxor.u32 %v238, 2147483648
    %v240 = vsel %vm157, %v239, %v238
    %v241 = vsub.s32 4, %v217
    %v242 = vsel %vm157, %v241, %v217
    %v243 = vsel %vm156, %v137, %v240
    %v244 = vsel %vm156, 0, %v242
    %v245 = vcosq.f32.pop %v243
    %v246 = vsinq.f32.pop %v243
    %vm247 = vweird.f32 %v137
    %v248 = vadd.s32 %v244, 3
    %v249 = vand.u32 %v248, 3
    %vm250 = vcmp.lt.s32.totalorder %v249, 2
    %vm251 = vcmp.eq.s32.totalorder %v249, 0
    %v252 = vxor.u32 %v246, 2147483648
    %v253 = vsel %vm251, %v245, %v252
    %vm254 = vcmp.eq.s32.totalorder %v249, 2
    %v255 = vxor.u32 %v245, 2147483648
    %v256 = vsel %vm254, %v255, %v246
    %v257 = vsel %vm250, %v253, %v256
    %v258 = vsel %vm247, nan, %v257
    %v259 = vand.u32 2147483647, %v142
    %vm260 = vcmp.le.f32.partialorder %v259, 0.7853982
    %vm261 = vcmp.lt.s32.totalorder %v142, 0
    %v262 = vand.u32 %v142, 2139095040
    %v263 = vshrl.u32 %v262, 23
    %v264 = vsub.s32 %v263, 127
    %v265 = vand.u32 2147483647, %v142
    %v266 = vand.u32 %v265, 8388607
    %v267 = vor.u32 %v266, 8388608
    %v268 = vsub.s32 0, %v267
    %v269 = vadd.s32 %v264, 1
    %vm270 = vcmp.gt.s32.totalorder %v269, 0
    %v271 = vsel %vm270, %v269, 0
    %v272 = vshrl.u32 %v271, 5
    %v273 = vand.u32 %v271, 31
    %v274 = vsub.s32 32, %v273
    %v275 = vshrl.u32 683565275, %v274
    %v276 = vshll.u32 683565275, %v273
    %v277 = vshrl.u32 2475754826, %v274
    %v278 = vor.u32 %v276, %v277
    %v279 = vshll.u32 2475754826, %v273
    %v280 = vshrl.u32 2131351028, %v274
    %v281 = vor.u32 %v279, %v280
    %v282 = vshll.u32 2131351028, %v273
    %v283 = vshrl.u32 2102212464, %v274
    %v284 = vor.u32 %v282, %v283
    %v285 = vshll.u32 2102212464, %v273
    %v286 = vshrl.u32 920167782, %v274
    %v287 = vor.u32 %v285, %v286
    %v288 = vshll.u32 920167782, %v273
    %v289 = vshrl.u32 1326507024, %v274
    %v290 = vor.u32 %v288, %v289
    %vm291 = vcmp.lt.s32.totalorder %v272, 1
    %vm292 = vcmp.lt.s32.totalorder %v272, 2
    %vm293 = vcmp.lt.s32.totalorder %v272, 3
    %vm294 = vcmp.lt.s32.totalorder %v272, 4
    %v295 = vsel %vm291, %v275, %v278
    %v296 = vsel %vm294, %v284, 2102212464
    %v297 = vsel %vm293, %v281, %v296
    %v298 = vsel %vm292, %v295, %v297
    %v299 = vsel %vm291, %v278, %v281
    %v300 = vsel %vm294, %v287, 920167782
    %v301 = vsel %vm293, %v284, %v300
    %v302 = vsel %vm292, %v299, %v301
    %v303 = vsel %vm291, %v281, %v284
    %v304 = vsel %vm294, %v290, 1326507024
    %v305 = vsel %vm293, %v287, %v304
    %v306 = vsel %vm292, %v303, %v305
    %v307 = vshll.u32 %v267, 8
    %v308 = vmul.u32.u64.compose %v307, %v306
    %v309 = vextract.low.u32 %v308
    %v310 = vextract.high.u32 %v308
    %v311 = vmul.u32.u64.compose %v307, %v302
    %v312 = vextract.low.u32 %v311
    %v313 = vextract.high.u32 %v311
    %v314 = vmul.u32 %v307, %v298
    %v315 = vadd.s32 %v310, %v312
    %vm316 = vc.u32 %v310, %v312
    %v317 = vadd.s32 %v313, 1
    %v318 = vsel %vm316, %v317, %v313
    %v319 = vadd.s32 %v314, %v318
    %v320 = vadd.s32 %v319, 536870912
    %v321 = vshrl.u32 %v320, 30
    %v322 = vshll.u32 %v321, 30
    %v323 = vsub.s32 %v319, %v322
    %vm324 = vcmp.lt.s32.totalorder %v323, 0
    %v325 = vsub.s32 0, %v323
    %v326 = vsel %vm324, %v325, %v323
    %v327 = vclz %v326
    %v328 = vsub.s32 %v327, 2
    %vm329 = vcmp.gt.s32.totalorder 0, %v328
    %v330 = vsel %vm329, 0, %v328
    %v331 = vsub.s32 32, %v330
    %v332 = vshll.u32 %v323, %v330
    %v333 = vshrl.u32 %v315, %v331
    %v334 = vor.u32 %v332, %v333
    %v335 = vsub.s32 4294967266, %v330
    %v336 = vadd.s32 %v335, 127
    %v337 = vshll.u32 %v336, 23
    %v338 = vor.u32 4788187, %v337
    %v339 = vand.u32 2147483647, %v338
    %v341 = vcvt.s32.f32 %v334
    %v342 = vmul.f32 %v341, %v339
    %v343 = vxor.u32 %v342, 2147483648
    %v344 = vsel %vm261, %v343, %v342
    %v345 = vsub.s32 4, %v321
    %v346 = vsel %vm261, %v345, %v321
    %v347 = vsel %vm260, %v142, %v344
    %v348 = vsel %vm260, 0, %v346
    %v349 = vcosq.f32.pop %v347
    %v350 = vsinq.f32.pop %v347
    %vm351 = vweird.f32 %v142
    %v352 = vadd.s32 %v348, 3
    %v353 = vand.u32 %v352, 3
    %vm354 = vcmp.lt.s32.totalorder %v353, 2
    %vm355 = vcmp.eq.s32.totalorder %v353, 0
    %v356 = vxor.u32 %v350, 2147483648
    %v357 = vsel %vm355, %v349, %v356
    %vm358 = vcmp.eq.s32.totalorder %v353, 2
    %v359 = vxor.u32 %v349, 2147483648
    %v360 = vsel %vm358, %v359, %v350
    %v361 = vsel %vm354, %v357, %v360
    %v362 = vsel %vm351, nan, %v361
    %v363 = vand.u32 2147483647, %v147
    %vm364 = vcmp.le.f32.partialorder %v363, 0.7853982
    %vm365 = vcmp.lt.s32.totalorder %v147, 0
    %v366 = vand.u32 %v147, 2139095040
    %v367 = vshrl.u32 %v366, 23
    %v368 = vsub.s32 %v367, 127
    %v369 = vand.u32 2147483647, %v147
    %v370 = vand.u32 %v369, 8388607
    %v371 = vor.u32 %v370, 8388608
    %v372 = vsub.s32 0, %v371
    %v373 = vadd.s32 %v368, 1
    %vm374 = vcmp.gt.s32.totalorder %v373, 0
    %v375 = vsel %vm374, %v373, 0
    %v376 = vshrl.u32 %v375, 5
    %v377 = vand.u32 %v375, 31
    %v378 = vsub.s32 32, %v377
    %v379 = vshrl.u32 683565275, %v378
    %v380 = vshll.u32 683565275, %v377
    %v381 = vshrl.u32 2475754826, %v378
    %v382 = vor.u32 %v380, %v381
    %v383 = vshll.u32 2475754826, %v377
    %v384 = vshrl.u32 2131351028, %v378
    %v385 = vor.u32 %v383, %v384
    %v386 = vshll.u32 2131351028, %v377
    %v387 = vshrl.u32 2102212464, %v378
    %v388 = vor.u32 %v386, %v387
    %v389 = vshll.u32 2102212464, %v377
    %v390 = vshrl.u32 920167782, %v378
    %v391 = vor.u32 %v389, %v390
    %v392 = vshll.u32 920167782, %v377
    %v393 = vshrl.u32 1326507024, %v378
    %v394 = vor.u32 %v392, %v393
    %vm395 = vcmp.lt.s32.totalorder %v376, 1
    %vm396 = vcmp.lt.s32.totalorder %v376, 2
    %vm397 = vcmp.lt.s32.totalorder %v376, 3
    %vm398 = vcmp.lt.s32.totalorder %v376, 4
    %v399 = vsel %vm395, %v379, %v382
    %v400 = vsel %vm398, %v388, 2102212464
    %v401 = vsel %vm397, %v385, %v400
    %v402 = vsel %vm396, %v399, %v401
    %v403 = vsel %vm395, %v382, %v385
    %v404 = vsel %vm398, %v391, 920167782
    %v405 = vsel %vm397, %v388, %v404
    %v406 = vsel %vm396, %v403, %v405
    %v407 = vsel %vm395, %v385, %v388
    %v408 = vsel %vm398, %v394, 1326507024
    %v409 = vsel %vm397, %v391, %v408
    %v410 = vsel %vm396, %v407, %v409
    %v411 = vshll.u32 %v371, 8
    %v412 = vmul.u32.u64.compose %v411, %v410
    %v413 = vextract.low.u32 %v412
    %v414 = vextract.high.u32 %v412
    %v415 = vmul.u32.u64.compose %v411, %v406
    %v416 = vextract.low.u32 %v415
    %v417 = vextract.high.u32 %v415
    %v418 = vmul.u32 %v411, %v402
    %v419 = vadd.s32 %v414, %v416
    %vm420 = vc.u32 %v414, %v416
    %v421 = vadd.s32 %v417, 1
    %v422 = vsel %vm420, %v421, %v417
    %v423 = vadd.s32 %v418, %v422
    %v424 = vadd.s32 %v423, 536870912
    %v425 = vshrl.u32 %v424, 30
    %v426 = vshll.u32 %v425, 30
    %v427 = vsub.s32 %v423, %v426
    %vm428 = vcmp.lt.s32.totalorder %v427, 0
    %v429 = vsub.s32 0, %v427
    %v430 = vsel %vm428, %v429, %v427
    %v431 = vclz %v430
    %v432 = vsub.s32 %v431, 2
    %vm433 = vcmp.gt.s32.totalorder 0, %v432
    %v434 = vsel %vm433, 0, %v432
    %v435 = vsub.s32 32, %v434
    %v436 = vshll.u32 %v427, %v434
    %v437 = vshrl.u32 %v419, %v435
    %v438 = vor.u32 %v436, %v437
    %v439 = vsub.s32 4294967266, %v434
    %v440 = vadd.s32 %v439, 127
    %v441 = vshll.u32 %v440, 23
    %v442 = vor.u32 4788187, %v441
    %v443 = vand.u32 2147483647, %v442
    %v445 = vcvt.s32.f32 %v438
    %v446 = vmul.f32 %v445, %v443
    %v447 = vxor.u32 %v446, 2147483648
    %v448 = vsel %vm365, %v447, %v446
    %v449 = vsub.s32 4, %v425
    %v450 = vsel %vm365, %v449, %v425
    %v451 = vsel %vm364, %v147, %v448
    %v452 = vsel %vm364, 0, %v450
    %v453 = vcosq.f32.pop %v451
    %v454 = vsinq.f32.pop %v451
    %vm455 = vweird.f32 %v147
    %v456 = vadd.s32 %v452, 3
    %v457 = vand.u32 %v456, 3
    %vm458 = vcmp.lt.s32.totalorder %v457, 2
    %vm459 = vcmp.eq.s32.totalorder %v457, 0
    %v460 = vxor.u32 %v454, 2147483648
    %v461 = vsel %vm459, %v453, %v460
    %vm462 = vcmp.eq.s32.totalorder %v457, 2
    %v463 = vxor.u32 %v453, 2147483648
    %v464 = vsel %vm462, %v463, %v454
    %v465 = vsel %vm458, %v461, %v464
    %v466 = vsel %vm455, nan, %v465
    %v467 = vand.u32 2147483647, %v152
    %vm468 = vcmp.le.f32.partialorder %v467, 0.7853982
    %vm469 = vcmp.lt.s32.totalorder %v152, 0
    %v470 = vand.u32 %v152, 2139095040
    %v471 = vshrl.u32 %v470, 23
    %v472 = vsub.s32 %v471, 127
    %v473 = vand.u32 2147483647, %v152
    %v474 = vand.u32 %v473, 8388607
    %v475 = vor.u32 %v474, 8388608
    %v476 = vsub.s32 0, %v475
    %v477 = vadd.s32 %v472, 1
    %vm478 = vcmp.gt.s32.totalorder %v477, 0
    %v479 = vsel %vm478, %v477, 0
    %v480 = vshrl.u32 %v479, 5
    %v481 = vand.u32 %v479, 31
    %v482 = vsub.s32 32, %v481
    %v483 = vshrl.u32 683565275, %v482
    %v484 = vshll.u32 683565275, %v481
    %v485 = vshrl.u32 2475754826, %v482
    %v486 = vor.u32 %v484, %v485
    %v487 = vshll.u32 2475754826, %v481
    %v488 = vshrl.u32 2131351028, %v482
    %v489 = vor.u32 %v487, %v488
    %v490 = vshll.u32 2131351028, %v481
    %v491 = vshrl.u32 2102212464, %v482
    %v492 = vor.u32 %v490, %v491
    %v493 = vshll.u32 2102212464, %v481
    %v494 = vshrl.u32 920167782, %v482
    %v495 = vor.u32 %v493, %v494
    %v496 = vshll.u32 920167782, %v481
    %v497 = vshrl.u32 1326507024, %v482
    %v498 = vor.u32 %v496, %v497
    %vm499 = vcmp.lt.s32.totalorder %v480, 1
    %vm500 = vcmp.lt.s32.totalorder %v480, 2
    %vm501 = vcmp.lt.s32.totalorder %v480, 3
    %vm502 = vcmp.lt.s32.totalorder %v480, 4
    %v503 = vsel %vm499, %v483, %v486
    %v504 = vsel %vm502, %v492, 2102212464
    %v505 = vsel %vm501, %v489, %v504
    %v506 = vsel %vm500, %v503, %v505
    %v507 = vsel %vm499, %v486, %v489
    %v508 = vsel %vm502, %v495, 920167782
    %v509 = vsel %vm501, %v492, %v508
    %v510 = vsel %vm500, %v507, %v509
    %v511 = vsel %vm499, %v489, %v492
    %v512 = vsel %vm502, %v498, 1326507024
    %v513 = vsel %vm501, %v495, %v512
    %v514 = vsel %vm500, %v511, %v513
    %v515 = vshll.u32 %v475, 8
    %v516 = vmul.u32.u64.compose %v515, %v514
    %v517 = vextract.low.u32 %v516
    %v518 = vextract.high.u32 %v516
    %v519 = vmul.u32.u64.compose %v515, %v510
    %v520 = vextract.low.u32 %v519
    %v521 = vextract.high.u32 %v519
    %v522 = vmul.u32 %v515, %v506
    %v523 = vadd.s32 %v518, %v520
    %vm524 = vc.u32 %v518, %v520
    %v525 = vadd.s32 %v521, 1
    %v526 = vsel %vm524, %v525, %v521
    %v527 = vadd.s32 %v522, %v526
    %v528 = vadd.s32 %v527, 536870912
    %v529 = vshrl.u32 %v528, 30
    %v530 = vshll.u32 %v529, 30
    %v531 = vsub.s32 %v527, %v530
    %vm532 = vcmp.lt.s32.totalorder %v531, 0
    %v533 = vsub.s32 0, %v531
    %v534 = vsel %vm532, %v533, %v531
    %v535 = vclz %v534
    %v536 = vsub.s32 %v535, 2
    %vm537 = vcmp.gt.s32.totalorder 0, %v536
    %v538 = vsel %vm537, 0, %v536
    %v539 = vsub.s32 32, %v538
    %v540 = vshll.u32 %v531, %v538
    %v541 = vshrl.u32 %v523, %v539
    %v542 = vor.u32 %v540, %v541
    %v543 = vsub.s32 4294967266, %v538
    %v544 = vadd.s32 %v543, 127
    %v545 = vshll.u32 %v544, 23
    %v546 = vor.u32 4788187, %v545
    %v547 = vand.u32 2147483647, %v546
    %v549 = vcvt.s32.f32 %v542
    %v550 = vmul.f32 %v549, %v547
    %v551 = vxor.u32 %v550, 2147483648
    %v552 = vsel %vm469, %v551, %v550
    %v553 = vsub.s32 4, %v529
    %v554 = vsel %vm469, %v553, %v529
    %v555 = vsel %vm468, %v152, %v552
    %v556 = vsel %vm468, 0, %v554
    %v557 = vcosq.f32.pop %v555
    %v558 = vsinq.f32.pop %v555
    %vm559 = vweird.f32 %v152
    %v560 = vadd.s32 %v556, 3
    %v561 = vand.u32 %v560, 3
    %vm562 = vcmp.lt.s32.totalorder %v561, 2
    %vm563 = vcmp.eq.s32.totalorder %v561, 0
    %v564 = vxor.u32 %v558, 2147483648
    %v565 = vsel %vm563, %v557, %v564
    %vm566 = vcmp.eq.s32.totalorder %v561, 2
    %v567 = vxor.u32 %v557, 2147483648
    %v568 = vsel %vm566, %v567, %v558
    %v569 = vsel %vm562, %v565, %v568
    %v570 = vsel %vm559, nan, %v569
    %571 = vst [vmem:[#allocation7] sm:$0xff] %v258
    %572 = vst [vmem:[#allocation7 + $0x8] sm:$0xff] %v362
    %573 = vst [vmem:[#allocation7 + $0x10] sm:$0xff] %v466
    %574 = vst [vmem:[#allocation7 + $0x18] sm:$0xff] %v570
    // Predicated region
    $region22: #{tpu_custom_call.1} parent=1 // pred_check
      _
    $region23: #{tpu_custom_call.1} parent=1 // pred_check_branch
      %576 = sbr.rel (0) target = $region25
    $region24: #{tpu_custom_call.1} parent=1 // pred_region
      %s578 = ssub.s32 512, 512
      %579 = vsyncadd [#allocation4], %s578
      %s580 = sshll.u32 [#allocation7], 4
      %s581 = int_to_ptr.vmem [resolvable:$true] %s580
      %586 = dma.vmem_to_hbm [thread:$0]  %s581, 512, %s3, [#allocation4], 128, 128, 8
    $region25: #{tpu_custom_call.1} parent=1 // pred_fallthru
      _
    // Predicated region
    $region26: #{tpu_custom_call.1} parent=1 // pred_check
      _
    $region27: #{tpu_custom_call.1} parent=1 // pred_check_branch
      %588 = sbr.rel (0) target = $region29
    $region28: #{tpu_custom_call.1} parent=1 // pred_region
      %589 = dma.done [#allocation4], 512
    $region29: #{tpu_custom_call.1} parent=1 // pred_fallthru
      _
    %590 = vsyncpa [#allocation3], 1
    %591 = vsyncpa [#allocation6], 1
    %592 = vsyncpa [#allocation4], 1

</llo_original>
